<compile_context>
chip_gen: v5e
topology: v5e:2x2
jax: 0.10.0
libtpu: 0.0.40
codegen_flags: <defaults>
</compile_context>

<pallas_src>
import functools

import jax
import jax.numpy as jnp
from jax import lax
from jax.experimental import pallas as pl
from jax.experimental.pallas import tpu as pltpu

_LANES = 128
_SUBLANE_MULT = {1: 32, 2: 16, 4: 8}      # min sublane multiple per itemsize
_TARGET_BLOCK_BYTES = 1024 * 1024          # ~1 MiB per operand per grid step


def _round_up(x: int, m: int) -> int:
    return (x + m - 1) // m * m


def _lsb_kernel(nbits_ref, cover_ref, bits_ref, out_ref, *, block_rows):
    """One (block_rows, 128) tile of the flattened image per grid step."""
    i = pl.program_id(0)
    n_bits = nbits_ref[0]                      # SMEM scalar (scalar prefetch)
    block_elems = block_rows * _LANES          # static python int
    block_start = i * block_elems              # traced int32 scalars
    block_end = block_start + block_elems

    x = cover_ref[...]
    # Exact torch constant (254); built via astype so 1-byte dtypes don't trap.
    lsb_mask = jnp.asarray(254, jnp.int32).astype(x.dtype)

    # Case 1: whole block lies inside the secret prefix -> unmasked LSB embed.
    @pl.when(block_end <= n_bits)
    def _():
        out_ref[...] = (x & lsb_mask) | bits_ref[...]

    # Case 2: whole block past the secret -> straight copy (bits never read).
    @pl.when(block_start >= n_bits)
    def _():
        out_ref[...] = x

    # Case 3: the single straddling block -> per-element mask with an iota.
    @pl.when(jnp.logical_and(block_start < n_bits, block_end > n_bits))
    def _():
        row = lax.broadcasted_iota(jnp.int32, (block_rows, _LANES), 0)
        col = lax.broadcasted_iota(jnp.int32, (block_rows, _LANES), 1)
        flat_idx = block_start + row * _LANES + col
        stego = (x & lsb_mask) | bits_ref[...]
        out_ref[...] = jnp.where(flat_idx < n_bits, stego, x)


@jax.jit
def lsb_emit(cover_image: jax.Array, secret_data: jax.Array) -> jax.Array:
    """LSB steganography embedding (forward of the torch LSBEmitter).

    cover_image: integer array (any shape / size, e.g. NCHW).
    secret_data: uint8 array of bytes (the secret message).
    """
    if not jnp.issubdtype(cover_image.dtype, jnp.integer):
        cover_image = cover_image.astype(jnp.int32)
    dtype = cover_image.dtype
    itemsize = jnp.dtype(dtype).itemsize
    sub_mult = _SUBLANE_MULT.get(itemsize, 8)

    n_elems = cover_image.size
    n_bits = int(secret_data.size) * 8
    if n_bits > n_elems:
        raise ValueError("Insufficient capacity in the cover image for the secret data.")

    # ---- tiling (all static: derived from shapes) ----
    rows_raw = -(-n_elems // _LANES)                       # ceil
    cap = max(sub_mult,
              (_TARGET_BLOCK_BYTES // (_LANES * itemsize)) // sub_mult * sub_mult)
    block_rows = min(cap, _round_up(rows_raw, sub_mult))
    padded_rows = _round_up(rows_raw, block_rows)
    padded_elems = padded_rows * _LANES
    block_elems = block_rows * _LANES
    grid_n = padded_rows // block_rows

    # ---- bytes -> bits (MSB first, matches format(byte,'08b')); pad only to
    #      a whole number of blocks, never to the full image size ----
    shifts = jnp.arange(7, -1, -1, dtype=jnp.int32)
    bits = ((secret_data.astype(jnp.int32)[:, None] >> shifts[None, :]) & 1).reshape(-1)
    bits_nblocks = max(1, -(-n_bits // block_elems))
    bits_padded = (jnp.zeros((bits_nblocks * block_elems,), dtype=dtype)
                   .at[:n_bits].set(bits.astype(dtype)))
    bits_2d = bits_padded.reshape(bits_nblocks * block_rows, _LANES)
    last_bits_block = bits_nblocks - 1

    # ---- flatten + pad the cover to a whole number of (block_rows,128) tiles ----
    cover_flat = cover_image.reshape(-1)
    if padded_elems != n_elems:
        cover_flat = jnp.pad(cover_flat, (0, padded_elems - n_elems))
    cover_2d = cover_flat.reshape(padded_rows, _LANES)

    nbits_arr = jnp.array([n_bits], dtype=jnp.int32)
    kernel = functools.partial(_lsb_kernel, block_rows=block_rows)

    out_2d = pl.pallas_call(
        kernel,
        out_shape=jax.ShapeDtypeStruct((padded_rows, _LANES), dtype),
        grid_spec=pltpu.PrefetchScalarGridSpec(
            num_scalar_prefetch=1,
            grid=(grid_n,),
            in_specs=[
                pl.BlockSpec((block_rows, _LANES), lambda i, nb: (i, 0)),
                # Clamp to the last bits block: past the secret prefix the
                # block index stops changing, so the pipeline skips the DMA.
                pl.BlockSpec((block_rows, _LANES),
                             lambda i, nb: (jnp.minimum(i, last_bits_block), 0)),
            ],
            out_specs=pl.BlockSpec((block_rows, _LANES), lambda i, nb: (i, 0)),
        ),
        compiler_params=pltpu.CompilerParams(
            dimension_semantics=("parallel",),   # independent blocks -> both TCs on v7x
        ),
        # cover is input slot 1 (slot 0 is the scalar-prefetch n_bits array)
        input_output_aliases={1: 0},
    )(nbits_arr, cover_2d, bits_2d)

    out_flat = out_2d.reshape(-1)
    if padded_elems != n_elems:
        out_flat = out_flat[:n_elems]
    return out_flat.reshape(cover_image.shape)


if __name__ == "__main__":
    key = jax.random.PRNGKey(0)
    k1, k2, k3, k4, k5, k6 = jax.random.split(key, 6)

    def reference(cover, secret):
        shifts = jnp.arange(7, -1, -1, dtype=jnp.int32)
        bits = ((secret.astype(jnp.int32)[:, None] >> shifts[None, :]) & 1).reshape(-1)
        flat = cover.reshape(-1)
        nb = bits.shape[0]
        return flat.at[:nb].set((flat[:nb] & 254) | bits.astype(flat.dtype)).reshape(cover.shape)

    # 1) small NCHW image + tiny secret (message_size = 8): single straddling block
    cover = jax.random.randint(k1, (2, 4, 16, 16), 0, 256, dtype=jnp.int32)
    secret = jax.random.randint(k2, (8,), 0, 256, dtype=jnp.int32).astype(jnp.uint8)
    stego = jax.block_until_ready(lsb_emit(cover, secret))
    assert stego.shape == cover.shape and stego.dtype == cover.dtype
    assert jnp.array_equal(stego, reference(cover, secret)), "mismatch (small image)"

    # 2) larger image, multi-block secret: exercises full / straddle / copy paths
    cover2 = jax.random.randint(k3, (16, 4, 128, 128), 0, 256, dtype=jnp.int32)
    secret2 = jax.random.randint(k4, (40000,), 0, 256, dtype=jnp.int32).astype(jnp.uint8)
    stego2 = jax.block_until_ready(lsb_emit(cover2, secret2))
    assert jnp.array_equal(stego2, reference(cover2, secret2)), "mismatch (large image)"

    # 3) ragged image size (not a multiple of 1024 elements): wrapper pad/slice path
    cover3 = jax.random.randint(k5, (3, 3, 10, 10), 0, 256, dtype=jnp.int32)
    secret3 = jax.random.randint(k6, (5,), 0, 256, dtype=jnp.int32).astype(jnp.uint8)
    stego3 = jax.block_until_ready(lsb_emit(cover3, secret3))
    assert jnp.array_equal(stego3, reference(cover3, secret3)), "mismatch (ragged image)"

    print("KERNEL_OK")
</pallas_src>

<mosaic_0001>
module attributes {stable_mosaic.version = 11 : i64} {
  func.func @_lsb_kernel(%arg0: i32, %arg1: memref<1xi32, #tpu.memory_space<smem>>, %arg2: memref<16x128xi32, #tpu.memory_space<vmem>>, %arg3: memref<16x128xi32, #tpu.memory_space<vmem>>, %arg4: memref<16x128xi32, #tpu.memory_space<vmem>>) attributes {dimension_semantics = [#tpu.dimension_semantics<parallel>], iteration_bounds = array<i64: 1>, scalar_prefetch = 1 : i64, scratch_operands = 0 : i64, tpu.core_type = #tpu.core_type<tc>, window_params = [{transform_indices = @transform_0, window_bounds = array<i64: 16, 128>}, {transform_indices = @transform_1, window_bounds = array<i64: 16, 128>}, {transform_indices = @transform_2, window_bounds = array<i64: 16, 128>}]} {
    %c0 = arith.constant 0 : index
    %0 = memref.load %arg1[%c0] : memref<1xi32, #tpu.memory_space<smem>>
    %c2048_i32 = arith.constant 2048 : i32
    %1 = arith.muli %arg0, %c2048_i32 : i32
    %c2048_i32_0 = arith.constant 2048 : i32
    %2 = arith.addi %1, %c2048_i32_0 : i32
    %c0_1 = arith.constant 0 : index
    %c0_2 = arith.constant 0 : index
    %3 = vector.load %arg2[%c0_1, %c0_2] : memref<16x128xi32, #tpu.memory_space<vmem>>, vector<16x128xi32>
    %4 = arith.cmpi sle, %2, %0 : i32
    %5 = arith.extui %4 : i1 to i32
    %c254_i32 = arith.constant 254 : i32
    %c0_i32 = arith.constant 0 : i32
    %6 = arith.cmpi ne, %5, %c0_i32 : i32
    scf.if %6 {
      %15 = vector.broadcast %c254_i32 : i32 to vector<16x128xi32>
      %16 = arith.andi %3, %15 : vector<16x128xi32>
      %c0_6 = arith.constant 0 : index
      %c0_7 = arith.constant 0 : index
      %17 = vector.load %arg3[%c0_6, %c0_7] : memref<16x128xi32, #tpu.memory_space<vmem>>, vector<16x128xi32>
      %18 = arith.ori %16, %17 : vector<16x128xi32>
      %c0_8 = arith.constant 0 : index
      %c0_9 = arith.constant 0 : index
      %19 = vector.load %arg4[%c0_8, %c0_9] : memref<16x128xi32, #tpu.memory_space<vmem>>, vector<16x128xi32>
      tpu.vector_store %arg4[%c0_8, %c0_9], %18 {strides = array<i32>} : memref<16x128xi32, #tpu.memory_space<vmem>>, vector<16x128xi32>,
    } else {
    }
    %7 = arith.cmpi sge, %1, %0 : i32
    %8 = arith.extui %7 : i1 to i32
    %c0_i32_3 = arith.constant 0 : i32
    %9 = arith.cmpi ne, %8, %c0_i32_3 : i32
    scf.if %9 {
      %c0_6 = arith.constant 0 : index
      %c0_7 = arith.constant 0 : index
      %15 = vector.load %arg4[%c0_6, %c0_7] : memref<16x128xi32, #tpu.memory_space<vmem>>, vector<16x128xi32>
      tpu.vector_store %arg4[%c0_6, %c0_7], %3 {strides = array<i32>} : memref<16x128xi32, #tpu.memory_space<vmem>>, vector<16x128xi32>,
    } else {
    }
    %10 = arith.cmpi slt, %1, %0 : i32
    %11 = arith.cmpi sgt, %2, %0 : i32
    %12 = arith.andi %10, %11 : i1
    %13 = arith.extui %12 : i1 to i32
    %c254_i32_4 = arith.constant 254 : i32
    %c0_i32_5 = arith.constant 0 : i32
    %14 = arith.cmpi ne, %13, %c0_i32_5 : i32
    scf.if %14 {
      %15 = tpu.iota {dimensions = array<i32: 0>} : vector<16x128xi32>
      %16 = tpu.iota {dimensions = array<i32: 1>} : vector<16x128xi32>
      %c128_i32 = arith.constant 128 : i32
      %17 = vector.broadcast %c128_i32 : i32 to vector<16x128xi32>
      %18 = arith.muli %15, %17 : vector<16x128xi32>
      %19 = vector.broadcast %1 : i32 to vector<16x128xi32>
      %20 = arith.addi %19, %18 : vector<16x128xi32>
      %21 = arith.addi %20, %16 : vector<16x128xi32>
      %22 = vector.broadcast %c254_i32_4 : i32 to vector<16x128xi32>
      %23 = arith.andi %3, %22 : vector<16x128xi32>
      %c0_6 = arith.constant 0 : index
      %c0_7 = arith.constant 0 : index
      %24 = vector.load %arg3[%c0_6, %c0_7] : memref<16x128xi32, #tpu.memory_space<vmem>>, vector<16x128xi32>
      %25 = arith.ori %23, %24 : vector<16x128xi32>
      %26 = vector.broadcast %0 : i32 to vector<16x128xi32>
      %27 = arith.cmpi slt, %21, %26 : vector<16x128xi32>
      %28 = arith.select %27, %25, %3 : vector<16x128xi1>, vector<16x128xi32>
      %c0_8 = arith.constant 0 : index
      %c0_9 = arith.constant 0 : index
      %29 = vector.load %arg4[%c0_8, %c0_9] : memref<16x128xi32, #tpu.memory_space<vmem>>, vector<16x128xi32>
      tpu.vector_store %arg4[%c0_8, %c0_9], %28 {strides = array<i32>} : memref<16x128xi32, #tpu.memory_space<vmem>>, vector<16x128xi32>,
    } else {
    }
    return
  }
  func.func @transform_0(%arg0: i32, %arg1: memref<1xi32, #tpu.memory_space<smem>>) -> (i32, i32) {
    %c0_i32 = arith.constant 0 : i32
    %c0_i32_0 = arith.constant 0 : i32
    return %arg0, %c0_i32 : i32, i32
  }
  func.func @transform_1(%arg0: i32, %arg1: memref<1xi32, #tpu.memory_space<smem>>) -> (i32, i32) {
    %c0_i32 = arith.constant 0 : i32
    %0 = arith.minsi %arg0, %c0_i32 : i32
    %c0_i32_0 = arith.constant 0 : i32
    %c0_i32_1 = arith.constant 0 : i32
    return %0, %c0_i32_0 : i32, i32
  }
  func.func @transform_2(%arg0: i32, %arg1: memref<1xi32, #tpu.memory_space<smem>>) -> (i32, i32) {
    %c0_i32 = arith.constant 0 : i32
    %c0_i32_0 = arith.constant 0 : i32
    return %arg0, %c0_i32 : i32, i32
  }
}

</mosaic_0001>

<llo_original>
// kernel: lsb_emit.1
$region0: #{lsb_emit.1}
  #allocation0 [shape = 'u32[]', space=smem, size = 0x4, offset = 0x4, fixed_abs, tag = 'smem constant byte address 0x4 - core index']
  #allocation1 [shape = 'u32[72,128]{1,0:T(1,128)}', space=vmem, size = 0x9000, scoped, tag = 'internal scratch']
  #allocation2 [shape = 's32[1]{0}', space=sflag, size = 0x4, scoped, tag = 'scoped memory for lsb_emit.1']
  #allocation3 [shape = 's32[1]{0:T(128)S(6)}', space=smem, size = 0x200, scoped, tag = 'prefetched SMEM operand 0']
  %s0 = inlined_call_operand.<no memory space> [shape: s32[1], index: 0, kind: input, shape index: {}]
  %s1 = inlined_call_operand.vmem [shape: s32[16,128], index: 1, kind: input, shape index: {}, may-alias: {1,3}]
  %s2 = inlined_call_operand.vmem [shape: s32[16,128], index: 2, kind: input, shape index: {}]
  %s3 = inlined_call_operand.vmem [shape: s32[16,128], index: 3, kind: output, shape index: {}, may-alias: {1,3}]
  %s4 = sld [smem:[#allocation0]]
  $region30: #{lsb_emit.1} parent=0
    _
  %s6 = ssub.s32 1, %s4
  %s7 = scalar_select 0, %s6, %s4
  %8 = sst [smem:[#allocation3]] %s0
  // Predicated region
  $region2: #{lsb_emit.1} parent=0 // pred_check
    _
  $region3: #{lsb_emit.1} parent=0 // pred_check_branch
    %10 = sbr.rel (0) target = $region5
  $region4: #{lsb_emit.1} parent=0 // pred_region
    _
  $region5: #{lsb_emit.1} parent=0 // pred_fallthru
    _
  // Predicated region
  $region6: #{lsb_emit.1} parent=0 // pred_check
    _
  $region7: #{lsb_emit.1} parent=0 // pred_check_branch
    %12 = sbr.rel (0) target = $region9
  $region8: #{lsb_emit.1} parent=0 // pred_region
    _
  $region9: #{lsb_emit.1} parent=0 // pred_fallthru
    _
  %s13 = sld [smem:[#allocation3]]
  %s14 = smul.u32 0, 2048
  %s15 = sadd.s32 %s14, 2048
  %v16 = vld [vmem:[%s1] sm:$0xff]
  %v17 = vld [vmem:[%s1 + $0x8] sm:$0xff]
  %p18 = scmp.le.s32.totalorder %s15, %s13
  // Predicated region
  $region10: #{lsb_emit.1} parent=0 // pred_check
    %p19 = pneg %p18
  $region11: #{lsb_emit.1} parent=0 // pred_check_branch
    %21 = sbr.rel (%p19) target = $region13
  $region12: #{lsb_emit.1} parent=0 // pred_region
    %v22 = vand.u32 %v16, 254
    %v23 = vand.u32 %v17, 254
    %v24 = vld [vmem:[%s2] sm:$0xff]
    %v25 = vld [vmem:[%s2 + $0x8] sm:$0xff]
    %v26 = vor.u32 %v22, %v24
    %v27 = vor.u32 %v23, %v25
    %28 = vst [vmem:[%s3] sm:$0xff] %v26
    %29 = vst [vmem:[%s3 + $0x8] sm:$0xff] %v27
  $region13: #{lsb_emit.1} parent=0 // pred_fallthru
    _
  %p30 = scmp.ge.s32.totalorder %s14, %s13
  // Predicated region
  $region14: #{lsb_emit.1} parent=0 // pred_check
    %p31 = pneg %p30
  $region15: #{lsb_emit.1} parent=0 // pred_check_branch
    %33 = sbr.rel (%p31) target = $region17
  $region16: #{lsb_emit.1} parent=0 // pred_region
    %34 = vst [vmem:[%s3] sm:$0xff] %v16
    %35 = vst [vmem:[%s3 + $0x8] sm:$0xff] %v17
  $region17: #{lsb_emit.1} parent=0 // pred_fallthru
    _
  %p36 = scmp.lt.s32.totalorder %s14, %s13
  %p37 = scmp.gt.s32.totalorder %s15, %s13
  %p38 = pnand %p36, %p37
  %p39 = pneg %p38
  // Predicated region
  $region18: #{lsb_emit.1} parent=0 // pred_check
    _
  $region19: #{lsb_emit.1} parent=0 // pred_check_branch
    %41 = sbr.rel (%p38) target = $region21
  $region20: #{lsb_emit.1} parent=0 // pred_region
    %v42 = vlaneseq
    %v43 = vshrl.u32 %v42, 7
    %v44 = vadd.s32 %v43, 8
    %v45 = vlaneseq
    %v46 = vand.u32 %v45, 127
    %v47 = vmul.u32 %v43, 128
    %v48 = vmul.u32 %v44, 128
    %v49 = vstv %s14
    %v50 = vadd.s32 %v49, %v47
    %v51 = vadd.s32 %v49, %v48
    %v52 = vadd.s32 %v50, %v46
    %v53 = vadd.s32 %v51, %v46
    %v54 = vand.u32 %v16, 254
    %v55 = vand.u32 %v17, 254
    %v56 = vld [vmem:[%s2] sm:$0xff]
    %v57 = vld [vmem:[%s2 + $0x8] sm:$0xff]
    %v58 = vor.u32 %v54, %v56
    %v59 = vor.u32 %v55, %v57
    %v60 = vstv %s13
    %vm61 = vcmp.lt.s32.totalorder %v52, %v60
    %vm62 = vcmp.lt.s32.totalorder %v53, %v60
    %v63 = vsel %vm61, %v58, %v16
    %v64 = vsel %vm62, %v59, %v17
    %65 = vst [vmem:[%s3] sm:$0xff] %v63
    %66 = vst [vmem:[%s3 + $0x8] sm:$0xff] %v64
  $region21: #{lsb_emit.1} parent=0 // pred_fallthru
    _
  // Predicated region
  $region22: #{lsb_emit.1} parent=0 // pred_check
    _
  $region23: #{lsb_emit.1} parent=0 // pred_check_branch
    %68 = sbr.rel (0) target = $region25
  $region24: #{lsb_emit.1} parent=0 // pred_region
    _
  $region25: #{lsb_emit.1} parent=0 // pred_fallthru
    _
  // Predicated region
  $region26: #{lsb_emit.1} parent=0 // pred_check
    _
  $region27: #{lsb_emit.1} parent=0 // pred_check_branch
    %70 = sbr.rel (0) target = $region29
  $region28: #{lsb_emit.1} parent=0 // pred_region
    _
  $region29: #{lsb_emit.1} parent=0 // pred_fallthru
    _

</llo_original>
